<compile_context>
chip_gen: v7x
topology: tpu7x:2x2x1
jax: 0.10.0
libtpu: 0.0.40
codegen_flags: <defaults>
</compile_context>

<pallas_src>
import jax
import jax.numpy as jnp
from jax.experimental import pallas as pl
from jax.experimental.pallas import tpu as pltpu


def _round_up(x: int, m: int) -> int:
    return ((x + m - 1) // m) * m


def _choose_pack(d: int, n_d: int, w_itemsize: int) -> int:
    """Number of batch rows folded into one packed (lane-dense) row.

    Prefer input-lane-dense packing (pack*d == 128) as long as the packed
    output width stays a multiple of 128; otherwise fall back to output-lane-
    dense packing; never let the block-diagonal packed weight exceed ~4 MiB.
    """
    candidates = []
    if d <= 128 and 128 % d == 0 and ((128 // d) * n_d) % 128 == 0:
        candidates.append(128 // d)          # input AND output lane-dense
    if n_d <= 128 and 128 % n_d == 0:
        candidates.append(128 // n_d)        # output lane-dense only
    candidates.append(1)
    for pack in candidates:
        if (pack * d) * (pack * n_d) * w_itemsize <= 4 * 1024 * 1024:
            return pack
    return 1


def _state_to_features_kernel(x_ref, w_ref, b_ref, o_ref):
    # x_ref: (tp, Kp)  packed, lane-dense input rows
    # w_ref: (Kp, Np)  block-diagonal packed weight (resident: same block
    #                  every grid step, so it is DMA'd once)
    # b_ref: (1,  Np)  tiled bias (resident)
    # o_ref: (tp, Np)  lane-dense packed output (Np is a multiple of 128 in
    #                  the main packing mode -> full-width unmasked stores)
    acc = jnp.dot(x_ref[...], w_ref[...], preferred_element_type=jnp.float32)
    y = acc + b_ref[...].astype(jnp.float32)
    o_ref[...] = jnp.maximum(y, 0.0).astype(o_ref.dtype)


def state_to_features(p_t: jax.Array, weight: jax.Array, bias: jax.Array,
                      *, tile_b: int | None = None,
                      out_dtype=None) -> jax.Array:
    """relu(p_t @ weight + bias) via a Pallas TPU kernel.

    p_t:    (B, d)
    weight: (d, n_d)   (transposed PyTorch Linear weight)
    bias:   (n_d,)
    """
    B, d = p_t.shape
    d_w, n_d = weight.shape
    assert d == d_w, "weight must be (d, n_d)"
    in_dtype = jnp.dtype(p_t.dtype)
    out_dtype = in_dtype if out_dtype is None else jnp.dtype(out_dtype)

    pack = _choose_pack(d, n_d, jnp.dtype(weight.dtype).itemsize)
    kp = pack * d        # packed contraction width (128 in the main mode)
    np_ = pack * n_d     # packed output width (multiple of 128 in the main mode)

    # Sublane alignment of packed-row tiles: 8 for 32-bit, 16 for 16-bit data.
    sub = 16 if min(in_dtype.itemsize, out_dtype.itemsize) == 2 else 8

    # Pad B only up to the packing factor (needed by the packing reshape);
    # ragged tiles are handled by Pallas boundary-block masking, not by
    # tile-sized wrapper padding.
    rows_p = pl.cdiv(B, pack)
    b_pack = rows_p * pack
    x = p_t if b_pack == B else jnp.pad(p_t, ((0, b_pack - B), (0, 0)))

    # Packed (lane-dense) views; row-major reshapes => no data movement.
    x_p = x.reshape(rows_p, kp)
    # Block-diagonal packed weight keeps the packed matvec exact:
    #   y_p[r, n_d*i + j] = sum_k x[pack*r + i, k] * W[k, j] + b[j]
    w_p = jnp.kron(jnp.eye(pack, dtype=weight.dtype), weight)   # (kp, np_)
    b_p = jnp.tile(bias, pack).reshape(1, np_)

    # Batch tile: target >= 4 MiB of HBM traffic per grid step so the ~0.35us
    # fixed per-step overhead is amortized.
    auto_tile = tile_b is None
    if auto_tile:
        bytes_per_row = d * in_dtype.itemsize + n_d * out_dtype.itemsize
        tile_b = (4 * 1024 * 1024) // max(bytes_per_row, 1)
    row_align = sub * pack
    tile_b = max(row_align, (int(tile_b) // row_align) * row_align)
    tp = tile_b // pack            # packed rows per tile (multiple of `sub`)

    if tp >= rows_p:
        # Single tile covering everything: a block dim equal to the full array
        # dim is always legal, even if it is not a multiple of the sublane.
        tp = rows_p
    grid_b = pl.cdiv(rows_p, tp)

    # v7x has two TensorCores: keep at least two "parallel" grid steps when
    # the batch is large enough so the batch axis can be megacore-sharded.
    if auto_tile and grid_b == 1 and rows_p >= 2 * sub:
        tp = _round_up(pl.cdiv(rows_p, 2), sub)
        grid_b = pl.cdiv(rows_p, tp)

    out_p = pl.pallas_call(
        _state_to_features_kernel,
        out_shape=jax.ShapeDtypeStruct((rows_p, np_), out_dtype),
        grid_spec=pltpu.PrefetchScalarGridSpec(
            num_scalar_prefetch=0,
            grid=(grid_b,),
            in_specs=[
                pl.BlockSpec((tp, kp), lambda i: (i, 0)),
                pl.BlockSpec((kp, np_), lambda i: (0, 0)),   # resident weight
                pl.BlockSpec((1, np_), lambda i: (0, 0)),    # resident bias
            ],
            out_specs=pl.BlockSpec((tp, np_), lambda i: (i, 0)),
        ),
        compiler_params=pltpu.CompilerParams(
            dimension_semantics=("parallel",)),
    )(x_p, w_p, b_p)

    out = out_p.reshape(b_pack, n_d)
    if b_pack != B:
        # Only for B % pack != 0: strip the <= pack-1 padded rows (they hold
        # relu(bias), not zeros).  Residual copy is bounded by one output pass.
        out = out[:B]
    return out


def _reference(p_t, weight, bias):
    return jnp.maximum(p_t @ weight + bias[None, :], 0.0)


if __name__ == "__main__":
    # Module hyperparameters: d = state dim, n_d = feature dim.
    d = 4
    n_d = 32

    key = jax.random.PRNGKey(0)
    k_w, k_b, k_x1, k_x2 = jax.random.split(key, 4)

    # Deterministic init mimicking PyTorch nn.Linear: U(-1/sqrt(d), 1/sqrt(d)).
    bound = 1.0 / jnp.sqrt(jnp.float32(d))
    weight = jax.random.uniform(k_w, (d, n_d), jnp.float32, -bound, bound)
    bias = jax.random.uniform(k_b, (n_d,), jnp.float32, -bound, bound)

    # 1) Small batch: single grid step, block dims clamp to full array dims.
    p_t = jax.random.normal(k_x1, (8, d), jnp.float32)
    out = jax.block_until_ready(state_to_features(p_t, weight, bias))
    ref = _reference(p_t, weight, bias)
    assert out.shape == (8, n_d)
    assert jnp.allclose(out, ref, atol=1e-5, rtol=1e-5)

    # 2) Ragged, multi-tile batch: grid of 3 with a partially out-of-bounds
    #    boundary block (exercises Pallas boundary masking; no tile-sized
    #    wrapper padding).
    p_t2 = jax.random.normal(k_x2, (600, d), jnp.float32)
    out2 = jax.block_until_ready(
        state_to_features(p_t2, weight, bias, tile_b=256))
    ref2 = _reference(p_t2, weight, bias)
    assert out2.shape == (600, n_d)
    assert jnp.allclose(out2, ref2, atol=1e-5, rtol=1e-5)

    # 3) bf16 output option (halves the dominant write stream; f32 accumulate).
    out3 = jax.block_until_ready(
        state_to_features(p_t2, weight, bias, tile_b=512,
                          out_dtype=jnp.bfloat16))
    assert out3.dtype == jnp.bfloat16
    assert jnp.allclose(out3.astype(jnp.float32), ref2, atol=5e-2, rtol=5e-2)

    print("KERNEL_OK")
</pallas_src>

<mosaic_0001>
module attributes {stable_mosaic.version = 11 : i64} {
  func.func @_state_to_features_kernel(%arg0: i32, %arg1: memref<1x128xf32, #tpu.memory_space<vmem>>, %arg2: memref<128x1024xf32, #tpu.memory_space<vmem>>, %arg3: memref<1x1024xf32, #tpu.memory_space<vmem>>, %arg4: memref<1x1024xf32, #tpu.memory_space<vmem>>) attributes {dimension_semantics = [#tpu.dimension_semantics<parallel>], iteration_bounds = array<i64: 1>, scalar_prefetch = 0 : i64, scratch_operands = 0 : i64, tpu.core_type = #tpu.core_type<tc>, window_params = [{transform_indices = @transform_0, window_bounds = array<i64: 1, 128>}, {pipeline_mode = #tpu.pipeline_mode<synchronous>, transform_indices = @transform_1, window_bounds = array<i64: 128, 1024>}, {pipeline_mode = #tpu.pipeline_mode<synchronous>, transform_indices = @transform_2, window_bounds = array<i64: 1, 1024>}, {transform_indices = @transform_3, window_bounds = array<i64: 1, 1024>}]} {
    %c0 = arith.constant 0 : index
    %c0_0 = arith.constant 0 : index
    %0 = vector.load %arg1[%c0, %c0_0] : memref<1x128xf32, #tpu.memory_space<vmem>>, vector<1x128xf32>
    %c0_1 = arith.constant 0 : index
    %c0_2 = arith.constant 0 : index
    %1 = vector.load %arg2[%c0_1, %c0_2] : memref<128x1024xf32, #tpu.memory_space<vmem>>, vector<128x1024xf32>
    %cst = arith.constant dense<0.000000e+00> : vector<1x1024xf32>
    %2 = tpu.matmul %0, %1, %cst {dimension_numbers = #tpu.dot_dimension_numbers<[1], [0], [0], [1], [0, 0, 1, 1], [], []>} : vector<1x128xf32>, vector<128x1024xf32>, vector<1x1024xf32> -> vector<1x1024xf32>
    %c0_3 = arith.constant 0 : index
    %c0_4 = arith.constant 0 : index
    %3 = vector.load %arg3[%c0_3, %c0_4] : memref<1x1024xf32, #tpu.memory_space<vmem>>, vector<1x1024xf32>
    %4 = arith.addf %2, %3 : vector<1x1024xf32>
    %cst_5 = arith.constant 0.000000e+00 : f32
    %5 = vector.broadcast %cst_5 : f32 to vector<1x1024xf32>
    %6 = arith.maximumf %4, %5 : vector<1x1024xf32>
    %c0_6 = arith.constant 0 : index
    %c0_7 = arith.constant 0 : index
    %7 = vector.load %arg4[%c0_6, %c0_7] : memref<1x1024xf32, #tpu.memory_space<vmem>>, vector<1x1024xf32>
    tpu.vector_store %arg4[%c0_6, %c0_7], %6 {strides = array<i32>} : memref<1x1024xf32, #tpu.memory_space<vmem>>, vector<1x1024xf32>,
    return
  }
  func.func @transform_0(%arg0: i32) -> (i32, i32) {
    %c0_i32 = arith.constant 0 : i32
    %c0_i32_0 = arith.constant 0 : i32
    return %arg0, %c0_i32 : i32, i32
  }
  func.func @transform_1(%arg0: i32) -> (i32, i32) {
    %c0_i32 = arith.constant 0 : i32
    %c0_i32_0 = arith.constant 0 : i32
    %c0_i32_1 = arith.constant 0 : i32
    return %c0_i32, %c0_i32_0 : i32, i32
  }
  func.func @transform_2(%arg0: i32) -> (i32, i32) {
    %c0_i32 = arith.constant 0 : i32
    %c0_i32_0 = arith.constant 0 : i32
    %c0_i32_1 = arith.constant 0 : i32
    return %c0_i32, %c0_i32_0 : i32, i32
  }
  func.func @transform_3(%arg0: i32) -> (i32, i32) {
    %c0_i32 = arith.constant 0 : i32
    %c0_i32_0 = arith.constant 0 : i32
    return %arg0, %c0_i32 : i32, i32
  }
}

</mosaic_0001>

<llo_original>
// kernel: tpu_custom_call.1
$region0: #{tpu_custom_call.1}
  #allocation0 [shape = 'u32[]', space=smem, size = 0x4, offset = 0x4, fixed_abs, tag = 'smem constant byte address 0x4 - core index']
  #allocation1 [shape = 'u32[144,128]{1,0:T(1,128)}', space=vmem, size = 0x12000, scoped, tag = 'internal scratch']
  %s0 = inlined_call_operand.hbm [shape: f32[1,128], index: 0, kind: input, shape index: {}]
  %s1 = inlined_call_operand.hbm [shape: f32[128,1024], index: 1, kind: input, shape index: {}]
  %s2 = inlined_call_operand.hbm [shape: f32[1,1024], index: 2, kind: input, shape index: {}]
  %s3 = inlined_call_operand.hbm [shape: f32[1,1024], index: 3, kind: output, shape index: {}]
  %s4 = sld [smem:[#allocation0]]
  $region34: #{tpu_custom_call.1} parent=0
    _
  %s6 = ssub.s32 1, %s4
  %s7 = scalar_select 0, %s6, %s4
  $region1: #{tpu_custom_call.1} parent=0
    #allocation2 [shape = 'u8[512]{0}', space=vmem, size = 0x400, scoped, tag = 'input window, operand 0, single buffered']
    #allocation3 [shape = 's32[1]{0}', space=sflag, size = 0x4, scoped, tag = 'scoped memory for tpu_custom_call.1']
    #allocation4 [shape = 's32[1]{0}', space=sflag, size = 0x4, scoped, tag = 'scoped memory for tpu_custom_call.1']
    #allocation5 [shape = 'u8[524288]{0}', space=vmem, size = 0x80000, scoped, tag = 'input window, operand 1, single buffered']
    #allocation6 [shape = 's32[1]{0}', space=sflag, size = 0x4, scoped, tag = 'scoped memory for tpu_custom_call.1']
    #allocation7 [shape = 'u8[4096]{0}', space=vmem, size = 0x1000, scoped, tag = 'input window, operand 2, single buffered']
    #allocation8 [shape = 'u8[4096]{0}', space=vmem, size = 0x1000, scoped, tag = 'output window, operand 0, single buffered']
    %8 = vsyncpa [#allocation3], 0
    %9 = vsyncpa [#allocation6], 0
    %10 = vsyncpa [#allocation4], 0
    // Predicated region
    $region2: #{tpu_custom_call.1} parent=1 // pred_check
      _
    $region3: #{tpu_custom_call.1} parent=1 // pred_check_branch
      %12 = sbr.rel (0) target = $region5
    $region4: #{tpu_custom_call.1} parent=1 // pred_region
      %s14 = ssub.s32 16, 16
      %15 = vsyncadd [#allocation3], %s14
      %s17 = sshll.u32 [#allocation2], 4
      %s18 = int_to_ptr.vmem [resolvable:$true] %s17
      %20 = dma.hbm_to_vmem [thread:$0]  %s0, 16, %s18, [#allocation3]
    $region5: #{tpu_custom_call.1} parent=1 // pred_fallthru
      _
    // Predicated region
    $region6: #{tpu_custom_call.1} parent=1 // pred_check
      _
    $region7: #{tpu_custom_call.1} parent=1 // pred_check_branch
      %22 = sbr.rel (0) target = $region9
    $region8: #{tpu_custom_call.1} parent=1 // pred_region
      %s24 = ssub.s32 16384, 16384
      %25 = vsyncadd [#allocation6], %s24
      %s26 = sshll.u32 [#allocation5], 4
      %s27 = int_to_ptr.vmem [resolvable:$true] %s26
      %32 = dma.hbm_to_vmem [thread:$0]  %s1, 16384, %s27, [#allocation6], 1024, 1024, 64
    $region9: #{tpu_custom_call.1} parent=1 // pred_fallthru
      _
    // Predicated region
    $region10: #{tpu_custom_call.1} parent=1 // pred_check
      _
    $region11: #{tpu_custom_call.1} parent=1 // pred_check_branch
      %34 = sbr.rel (0) target = $region13
    $region12: #{tpu_custom_call.1} parent=1 // pred_region
      %s36 = ssub.s32 128, 128
      %37 = vsyncadd [#allocation6], %s36
      %s39 = sshll.u32 [#allocation7], 4
      %s40 = int_to_ptr.vmem [resolvable:$true] %s39
      %42 = dma.hbm_to_vmem [thread:$0]  %s2, 128, %s40, [#allocation6]
    $region13: #{tpu_custom_call.1} parent=1 // pred_fallthru
      _
    // Predicated region
    $region14: #{tpu_custom_call.1} parent=1 // pred_check
      _
    $region15: #{tpu_custom_call.1} parent=1 // pred_check_branch
      %44 = sbr.rel (0) target = $region17
    $region16: #{tpu_custom_call.1} parent=1 // pred_region
      %45 = dma.done [#allocation3], 16
    $region17: #{tpu_custom_call.1} parent=1 // pred_fallthru
      _
    // Predicated region
    $region18: #{tpu_custom_call.1} parent=1 // pred_check
      _
    $region19: #{tpu_custom_call.1} parent=1 // pred_check_branch
      %47 = sbr.rel (0) target = $region21
    $region20: #{tpu_custom_call.1} parent=1 // pred_region
      %48 = dma.done [#allocation6], 16384
    $region21: #{tpu_custom_call.1} parent=1 // pred_fallthru
      _
    // Predicated region
    $region22: #{tpu_custom_call.1} parent=1 // pred_check
      _
    $region23: #{tpu_custom_call.1} parent=1 // pred_check_branch
      %50 = sbr.rel (0) target = $region25
    $region24: #{tpu_custom_call.1} parent=1 // pred_region
      %51 = dma.done [#allocation6], 128
    $region25: #{tpu_custom_call.1} parent=1 // pred_fallthru
      _
    %v52 = vld [vmem:[#allocation2] sm:$0x1]
    %v53 = vld [vmem:[#allocation5] sm:$0xff]
    %v54 = vld [vmem:[#allocation5 + $0x8] sm:$0xff]
    %v55 = vld [vmem:[#allocation5 + $0x10] sm:$0xff]
    %v56 = vld [vmem:[#allocation5 + $0x18] sm:$0xff]
    %v57 = vld [vmem:[#allocation5 + $0x20] sm:$0xff]
    %v58 = vld [vmem:[#allocation5 + $0x28] sm:$0xff]
    %v59 = vld [vmem:[#allocation5 + $0x30] sm:$0xff]
    %v60 = vld [vmem:[#allocation5 + $0x38] sm:$0xff]
    %v61 = vld [vmem:[#allocation5 + $0x40] sm:$0xff]
    %v62 = vld [vmem:[#allocation5 + $0x48] sm:$0xff]
    %v63 = vld [vmem:[#allocation5 + $0x50] sm:$0xff]
    %v64 = vld [vmem:[#allocation5 + $0x58] sm:$0xff]
    %v65 = vld [vmem:[#allocation5 + $0x60] sm:$0xff]
    %v66 = vld [vmem:[#allocation5 + $0x68] sm:$0xff]
    %v67 = vld [vmem:[#allocation5 + $0x70] sm:$0xff]
    %v68 = vld [vmem:[#allocation5 + $0x78] sm:$0xff]
    %v69 = vld [vmem:[#allocation5 + $0x80] sm:$0xff]
    %v70 = vld [vmem:[#allocation5 + $0x88] sm:$0xff]
    %v71 = vld [vmem:[#allocation5 + $0x90] sm:$0xff]
    %v72 = vld [vmem:[#allocation5 + $0x98] sm:$0xff]
    %v73 = vld [vmem:[#allocation5 + $0xa0] sm:$0xff]
    %v74 = vld [vmem:[#allocation5 + $0xa8] sm:$0xff]
    %v75 = vld [vmem:[#allocation5 + $0xb0] sm:$0xff]
    %v76 = vld [vmem:[#allocation5 + $0xb8] sm:$0xff]
    %v77 = vld [vmem:[#allocation5 + $0xc0] sm:$0xff]
    %v78 = vld [vmem:[#allocation5 + $0xc8] sm:$0xff]
    %v79 = vld [vmem:[#allocation5 + $0xd0] sm:$0xff]
    %v80 = vld [vmem:[#allocation5 + $0xd8] sm:$0xff]
    %v81 = vld [vmem:[#allocation5 + $0xe0] sm:$0xff]
    %v82 = vld [vmem:[#allocation5 + $0xe8] sm:$0xff]
    %v83 = vld [vmem:[#allocation5 + $0xf0] sm:$0xff]
    %v84 = vld [vmem:[#allocation5 + $0xf8] sm:$0xff]
    %v85 = vld [vmem:[#allocation5 + $0x100] sm:$0xff]
    %v86 = vld [vmem:[#allocation5 + $0x108] sm:$0xff]
    %v87 = vld [vmem:[#allocation5 + $0x110] sm:$0xff]
    %v88 = vld [vmem:[#allocation5 + $0x118] sm:$0xff]
    %v89 = vld [vmem:[#allocation5 + $0x120] sm:$0xff]
    %v90 = vld [vmem:[#allocation5 + $0x128] sm:$0xff]
    %v91 = vld [vmem:[#allocation5 + $0x130] sm:$0xff]
    %v92 = vld [vmem:[#allocation5 + $0x138] sm:$0xff]
    %v93 = vld [vmem:[#allocation5 + $0x140] sm:$0xff]
    %v94 = vld [vmem:[#allocation5 + $0x148] sm:$0xff]
    %v95 = vld [vmem:[#allocation5 + $0x150] sm:$0xff]
    %v96 = vld [vmem:[#allocation5 + $0x158] sm:$0xff]
    %v97 = vld [vmem:[#allocation5 + $0x160] sm:$0xff]
    %v98 = vld [vmem:[#allocation5 + $0x168] sm:$0xff]
    %v99 = vld [vmem:[#allocation5 + $0x170] sm:$0xff]
    %v100 = vld [vmem:[#allocation5 + $0x178] sm:$0xff]
    %v101 = vld [vmem:[#allocation5 + $0x180] sm:$0xff]
    %v102 = vld [vmem:[#allocation5 + $0x188] sm:$0xff]
    %v103 = vld [vmem:[#allocation5 + $0x190] sm:$0xff]
    %v104 = vld [vmem:[#allocation5 + $0x198] sm:$0xff]
    %v105 = vld [vmem:[#allocation5 + $0x1a0] sm:$0xff]
    %v106 = vld [vmem:[#allocation5 + $0x1a8] sm:$0xff]
    %v107 = vld [vmem:[#allocation5 + $0x1b0] sm:$0xff]
    %v108 = vld [vmem:[#allocation5 + $0x1b8] sm:$0xff]
    %v109 = vld [vmem:[#allocation5 + $0x1c0] sm:$0xff]
    %v110 = vld [vmem:[#allocation5 + $0x1c8] sm:$0xff]
    %v111 = vld [vmem:[#allocation5 + $0x1d0] sm:$0xff]
    %v112 = vld [vmem:[#allocation5 + $0x1d8] sm:$0xff]
    %v113 = vld [vmem:[#allocation5 + $0x1e0] sm:$0xff]
    %v114 = vld [vmem:[#allocation5 + $0x1e8] sm:$0xff]
    %v115 = vld [vmem:[#allocation5 + $0x1f0] sm:$0xff]
    %v116 = vld [vmem:[#allocation5 + $0x1f8] sm:$0xff]
    %v117 = vld [vmem:[#allocation5 + $0x200] sm:$0xff]
    %v118 = vld [vmem:[#allocation5 + $0x208] sm:$0xff]
    %v119 = vld [vmem:[#allocation5 + $0x210] sm:$0xff]
    %v120 = vld [vmem:[#allocation5 + $0x218] sm:$0xff]
    %v121 = vld [vmem:[#allocation5 + $0x220] sm:$0xff]
    %v122 = vld [vmem:[#allocation5 + $0x228] sm:$0xff]
    %v123 = vld [vmem:[#allocation5 + $0x230] sm:$0xff]
    %v124 = vld [vmem:[#allocation5 + $0x238] sm:$0xff]
    %v125 = vld [vmem:[#allocation5 + $0x240] sm:$0xff]
    %v126 = vld [vmem:[#allocation5 + $0x248] sm:$0xff]
    %v127 = vld [vmem:[#allocation5 + $0x250] sm:$0xff]
    %v128 = vld [vmem:[#allocation5 + $0x258] sm:$0xff]
    %v129 = vld [vmem:[#allocation5 + $0x260] sm:$0xff]
    %v130 = vld [vmem:[#allocation5 + $0x268] sm:$0xff]
    %v131 = vld [vmem:[#allocation5 + $0x270] sm:$0xff]
    %v132 = vld [vmem:[#allocation5 + $0x278] sm:$0xff]
    %v133 = vld [vmem:[#allocation5 + $0x280] sm:$0xff]
    %v134 = vld [vmem:[#allocation5 + $0x288] sm:$0xff]
    %v135 = vld [vmem:[#allocation5 + $0x290] sm:$0xff]
    %v136 = vld [vmem:[#allocation5 + $0x298] sm:$0xff]
    %v137 = vld [vmem:[#allocation5 + $0x2a0] sm:$0xff]
    %v138 = vld [vmem:[#allocation5 + $0x2a8] sm:$0xff]
    %v139 = vld [vmem:[#allocation5 + $0x2b0] sm:$0xff]
    %v140 = vld [vmem:[#allocation5 + $0x2b8] sm:$0xff]
    %v141 = vld [vmem:[#allocation5 + $0x2c0] sm:$0xff]
    %v142 = vld [vmem:[#allocation5 + $0x2c8] sm:$0xff]
    %v143 = vld [vmem:[#allocation5 + $0x2d0] sm:$0xff]
    %v144 = vld [vmem:[#allocation5 + $0x2d8] sm:$0xff]
    %v145 = vld [vmem:[#allocation5 + $0x2e0] sm:$0xff]
    %v146 = vld [vmem:[#allocation5 + $0x2e8] sm:$0xff]
    %v147 = vld [vmem:[#allocation5 + $0x2f0] sm:$0xff]
    %v148 = vld [vmem:[#allocation5 + $0x2f8] sm:$0xff]
    %v149 = vld [vmem:[#allocation5 + $0x300] sm:$0xff]
    %v150 = vld [vmem:[#allocation5 + $0x308] sm:$0xff]
    %v151 = vld [vmem:[#allocation5 + $0x310] sm:$0xff]
    %v152 = vld [vmem:[#allocation5 + $0x318] sm:$0xff]
    %v153 = vld [vmem:[#allocation5 + $0x320] sm:$0xff]
    %v154 = vld [vmem:[#allocation5 + $0x328] sm:$0xff]
    %v155 = vld [vmem:[#allocation5 + $0x330] sm:$0xff]
    %v156 = vld [vmem:[#allocation5 + $0x338] sm:$0xff]
    %v157 = vld [vmem:[#allocation5 + $0x340] sm:$0xff]
    %v158 = vld [vmem:[#allocation5 + $0x348] sm:$0xff]
    %v159 = vld [vmem:[#allocation5 + $0x350] sm:$0xff]
    %v160 = vld [vmem:[#allocation5 + $0x358] sm:$0xff]
    %v161 = vld [vmem:[#allocation5 + $0x360] sm:$0xff]
    %v162 = vld [vmem:[#allocation5 + $0x368] sm:$0xff]
    %v163 = vld [vmem:[#allocation5 + $0x370] sm:$0xff]
    %v164 = vld [vmem:[#allocation5 + $0x378] sm:$0xff]
    %v165 = vld [vmem:[#allocation5 + $0x380] sm:$0xff]
    %v166 = vld [vmem:[#allocation5 + $0x388] sm:$0xff]
    %v167 = vld [vmem:[#allocation5 + $0x390] sm:$0xff]
    %v168 = vld [vmem:[#allocation5 + $0x398] sm:$0xff]
    %v169 = vld [vmem:[#allocation5 + $0x3a0] sm:$0xff]
    %v170 = vld [vmem:[#allocation5 + $0x3a8] sm:$0xff]
    %v171 = vld [vmem:[#allocation5 + $0x3b0] sm:$0xff]
    %v172 = vld [vmem:[#allocation5 + $0x3b8] sm:$0xff]
    %v173 = vld [vmem:[#allocation5 + $0x3c0] sm:$0xff]
    %v174 = vld [vmem:[#allocation5 + $0x3c8] sm:$0xff]
    %v175 = vld [vmem:[#allocation5 + $0x3d0] sm:$0xff]
    %v176 = vld [vmem:[#allocation5 + $0x3d8] sm:$0xff]
    %v177 = vld [vmem:[#allocation5 + $0x3e0] sm:$0xff]
    %v178 = vld [vmem:[#allocation5 + $0x3e8] sm:$0xff]
    %v179 = vld [vmem:[#allocation5 + $0x3f0] sm:$0xff]
    %v180 = vld [vmem:[#allocation5 + $0x3f8] sm:$0xff]
    %v181 = vld [vmem:[#allocation7] sm:$0xff]
    %v183 = vlaneseq
    %v184 = vshrl.u32 %v183, 7
    %v185 = vsub.s32 0, %v184
    %v186 = vrot.slane %v181, %v185
    %v187 = vlaneseq
    %v188 = vshrl.u32 %v187, 7
    %v189 = vsub.s32 1, %v188
    %v190 = vrot.slane %v181, %v189
    %v191 = vlaneseq
    %v192 = vshrl.u32 %v191, 7
    %v193 = vsub.s32 2, %v192
    %v194 = vrot.slane %v181, %v193
    %v195 = vlaneseq
    %v196 = vshrl.u32 %v195, 7
    %v197 = vsub.s32 3, %v196
    %v198 = vrot.slane %v181, %v197
    %v199 = vlaneseq
    %v200 = vshrl.u32 %v199, 7
    %v201 = vsub.s32 4, %v200
    %v202 = vrot.slane %v181, %v201
    %v203 = vlaneseq
    %v204 = vshrl.u32 %v203, 7
    %v205 = vsub.s32 5, %v204
    %v206 = vrot.slane %v181, %v205
    %v207 = vlaneseq
    %v208 = vshrl.u32 %v207, 7
    %v209 = vsub.s32 6, %v208
    %v210 = vrot.slane %v181, %v209
    %v211 = vlaneseq
    %v212 = vshrl.u32 %v211, 7
    %v213 = vsub.s32 7, %v212
    %v214 = vrot.slane %v181, %v213
    %223 = vmatprep.subr.mxu0 %v54
    %224 = vmatpush1.msra.mxu0 %v53
    %225 = vmatprep.subr.mxu0 %v62
    %226 = vmatpush1.msra.mxu0 %v61
    %227 = vmatprep.subr.mxu0 %v70
    %228 = vmatpush1.msra.mxu0 %v69
    %229 = vmatprep.subr.mxu0 %v78
    %230 = vmatpush1.msra.mxu0 %v77
    %231 = vmatprep.subr.mxu0 %v86
    %232 = vmatpush1.msra.mxu0 %v85
    %233 = vmatprep.subr.mxu0 %v94
    %234 = vmatpush1.msra.mxu0 %v93
    %235 = vmatprep.subr.mxu0 %v102
    %236 = vmatpush1.msra.mxu0 %v101
    %237 = vmatprep.subr.mxu0 %v110
    %238 = vmatpush1.msra.mxu0 %v109
    %239 = vmatprep.subr.mxu0 %v118
    %240 = vmatpush1.msra.mxu0 %v117
    %241 = vmatprep.subr.mxu0 %v126
    %242 = vmatpush1.msra.mxu0 %v125
    %243 = vmatprep.subr.mxu0 %v134
    %244 = vmatpush1.msra.mxu0 %v133
    %245 = vmatprep.subr.mxu0 %v142
    %246 = vmatpush1.msra.mxu0 %v141
    %247 = vmatprep.subr.mxu0 %v150
    %248 = vmatpush1.msra.mxu0 %v149
    %249 = vmatprep.subr.mxu0 %v158
    %250 = vmatpush1.msra.mxu0 %v157
    %251 = vmatprep.subr.mxu0 %v166
    %252 = vmatpush1.msra.mxu0 %v165
    %253 = vmatprep.subr.mxu0 %v174
    %254 = vmatpush1.msra.mxu0 %v173
    %255 = vmatprep.subr.mxu0 0.0
    %256 = vmatpush1.msra.mxu0 0.0
    %257 = vmatprep.subr.mxu0 0.0
    %258 = vmatpush1.msra.mxu0 0.0
    %259 = vmatprep.subr.mxu0 0.0
    %260 = vmatpush1.msra.mxu0 0.0
    %261 = vmatprep.subr.mxu0 0.0
    %262 = vmatpush1.msra.mxu0 0.0
    %263 = vmatprep.subr.mxu0 0.0
    %264 = vmatpush1.msra.mxu0 0.0
    %265 = vmatprep.subr.mxu0 0.0
    %266 = vmatpush1.msra.mxu0 0.0
    %267 = vmatprep.subr.mxu0 0.0
    %268 = vmatpush1.msra.mxu0 0.0
    %269 = vmatprep.subr.mxu0 0.0
    %270 = vmatpush1.msra.mxu0 0.0
    %271 = vmatprep.subr.mxu0 0.0
    %272 = vmatpush1.msra.mxu0 0.0
    %273 = vmatprep.subr.mxu0 0.0
    %274 = vmatpush1.msra.mxu0 0.0
    %275 = vmatprep.subr.mxu0 0.0
    %276 = vmatpush1.msra.mxu0 0.0
    %277 = vmatprep.subr.mxu0 0.0
    %278 = vmatpush1.msra.mxu0 0.0
    %279 = vmatprep.subr.mxu0 0.0
    %280 = vmatpush1.msra.mxu0 0.0
    %281 = vmatprep.subr.mxu0 0.0
    %282 = vmatpush1.msra.mxu0 0.0
    %283 = vmatprep.subr.mxu0 0.0
    %284 = vmatpush1.msra.mxu0 0.0
    %285 = vmatprep.subr.mxu0 0.0
    %286 = vmatpush1.msra.mxu0 0.0
    %287 = vmatprep.mubr.f32.mxu0 0.0
    %288 = vmatmul.mubr.f32.gmra.mrb[0].mxu0 %v52
    %v289 = vpop.f32.mrb[0].mxu0
    %v290 = vadd.f32 %v186, %v289
    %v291 = vpop.f32.mrb[0].mxu0
    %v292 = vadd.f32 %v190, %v291
    %293 = vdwg.mxu0
    %294 = vmatprep.subr.mxu0 %v56
    %295 = vmatpush1.msra.mxu0 %v55
    %296 = vmatprep.subr.mxu0 %v64
    %297 = vmatpush1.msra.mxu0 %v63
    %298 = vmatprep.subr.mxu0 %v72
    %299 = vmatpush1.msra.mxu0 %v71
    %300 = vmatprep.subr.mxu0 %v80
    %301 = vmatpush1.msra.mxu0 %v79
    %302 = vmatprep.subr.mxu0 %v88
    %303 = vmatpush1.msra.mxu0 %v87
    %304 = vmatprep.subr.mxu0 %v96
    %305 = vmatpush1.msra.mxu0 %v95
    %306 = vmatprep.subr.mxu0 %v104
    %307 = vmatpush1.msra.mxu0 %v103
    %308 = vmatprep.subr.mxu0 %v112
    %309 = vmatpush1.msra.mxu0 %v111
    %310 = vmatprep.subr.mxu0 %v120
    %311 = vmatpush1.msra.mxu0 %v119
    %312 = vmatprep.subr.mxu0 %v128
    %313 = vmatpush1.msra.mxu0 %v127
    %314 = vmatprep.subr.mxu0 %v136
    %315 = vmatpush1.msra.mxu0 %v135
    %316 = vmatprep.subr.mxu0 %v144
    %317 = vmatpush1.msra.mxu0 %v143
    %318 = vmatprep.subr.mxu0 %v152
    %319 = vmatpush1.msra.mxu0 %v151
    %320 = vmatprep.subr.mxu0 %v160
    %321 = vmatpush1.msra.mxu0 %v159
    %322 = vmatprep.subr.mxu0 %v168
    %323 = vmatpush1.msra.mxu0 %v167
    %324 = vmatprep.subr.mxu0 %v176
    %325 = vmatpush1.msra.mxu0 %v175
    %326 = vmatprep.subr.mxu0 0.0
    %327 = vmatpush1.msra.mxu0 0.0
    %328 = vmatprep.subr.mxu0 0.0
    %329 = vmatpush1.msra.mxu0 0.0
    %330 = vmatprep.subr.mxu0 0.0
    %331 = vmatpush1.msra.mxu0 0.0
    %332 = vmatprep.subr.mxu0 0.0
    %333 = vmatpush1.msra.mxu0 0.0
    %334 = vmatprep.subr.mxu0 0.0
    %335 = vmatpush1.msra.mxu0 0.0
    %336 = vmatprep.subr.mxu0 0.0
    %337 = vmatpush1.msra.mxu0 0.0
    %338 = vmatprep.subr.mxu0 0.0
    %339 = vmatpush1.msra.mxu0 0.0
    %340 = vmatprep.subr.mxu0 0.0
    %341 = vmatpush1.msra.mxu0 0.0
    %342 = vmatprep.subr.mxu0 0.0
    %343 = vmatpush1.msra.mxu0 0.0
    %344 = vmatprep.subr.mxu0 0.0
    %345 = vmatpush1.msra.mxu0 0.0
    %346 = vmatprep.subr.mxu0 0.0
    %347 = vmatpush1.msra.mxu0 0.0
    %348 = vmatprep.subr.mxu0 0.0
    %349 = vmatpush1.msra.mxu0 0.0
    %350 = vmatprep.subr.mxu0 0.0
    %351 = vmatpush1.msra.mxu0 0.0
    %352 = vmatprep.subr.mxu0 0.0
    %353 = vmatpush1.msra.mxu0 0.0
    %354 = vmatprep.subr.mxu0 0.0
    %355 = vmatpush1.msra.mxu0 0.0
    %356 = vmatprep.subr.mxu0 0.0
    %357 = vmatpush1.msra.mxu0 0.0
    %358 = vmatprep.mubr.f32.mxu0 0.0
    %359 = vmatmul.mubr.f32.gmra.mrb[0].mxu0 %v52
    %v360 = vpop.f32.mrb[0].mxu0
    %v361 = vadd.f32 %v194, %v360
    %v362 = vpop.f32.mrb[0].mxu0
    %v363 = vadd.f32 %v198, %v362
    %364 = vdwg.mxu0
    %365 = vmatprep.subr.mxu0 %v58
    %366 = vmatpush1.msra.mxu0 %v57
    %367 = vmatprep.subr.mxu0 %v66
    %368 = vmatpush1.msra.mxu0 %v65
    %369 = vmatprep.subr.mxu0 %v74
    %370 = vmatpush1.msra.mxu0 %v73
    %371 = vmatprep.subr.mxu0 %v82
    %372 = vmatpush1.msra.mxu0 %v81
    %373 = vmatprep.subr.mxu0 %v90
    %374 = vmatpush1.msra.mxu0 %v89
    %375 = vmatprep.subr.mxu0 %v98
    %376 = vmatpush1.msra.mxu0 %v97
    %377 = vmatprep.subr.mxu0 %v106
    %378 = vmatpush1.msra.mxu0 %v105
    %379 = vmatprep.subr.mxu0 %v114
    %380 = vmatpush1.msra.mxu0 %v113
    %381 = vmatprep.subr.mxu0 %v122
    %382 = vmatpush1.msra.mxu0 %v121
    %383 = vmatprep.subr.mxu0 %v130
    %384 = vmatpush1.msra.mxu0 %v129
    %385 = vmatprep.subr.mxu0 %v138
    %386 = vmatpush1.msra.mxu0 %v137
    %387 = vmatprep.subr.mxu0 %v146
    %388 = vmatpush1.msra.mxu0 %v145
    %389 = vmatprep.subr.mxu0 %v154
    %390 = vmatpush1.msra.mxu0 %v153
    %391 = vmatprep.subr.mxu0 %v162
    %392 = vmatpush1.msra.mxu0 %v161
    %393 = vmatprep.subr.mxu0 %v170
    %394 = vmatpush1.msra.mxu0 %v169
    %395 = vmatprep.subr.mxu0 %v178
    %396 = vmatpush1.msra.mxu0 %v177
    %397 = vmatprep.subr.mxu0 0.0
    %398 = vmatpush1.msra.mxu0 0.0
    %399 = vmatprep.subr.mxu0 0.0
    %400 = vmatpush1.msra.mxu0 0.0
    %401 = vmatprep.subr.mxu0 0.0
    %402 = vmatpush1.msra.mxu0 0.0
    %403 = vmatprep.subr.mxu0 0.0
    %404 = vmatpush1.msra.mxu0 0.0
    %405 = vmatprep.subr.mxu0 0.0
    %406 = vmatpush1.msra.mxu0 0.0
    %407 = vmatprep.subr.mxu0 0.0
    %408 = vmatpush1.msra.mxu0 0.0
    %409 = vmatprep.subr.mxu0 0.0
    %410 = vmatpush1.msra.mxu0 0.0
    %411 = vmatprep.subr.mxu0 0.0
    %412 = vmatpush1.msra.mxu0 0.0
    %413 = vmatprep.subr.mxu0 0.0
    %414 = vmatpush1.msra.mxu0 0.0
    %415 = vmatprep.subr.mxu0 0.0
    %416 = vmatpush1.msra.mxu0 0.0
    %417 = vmatprep.subr.mxu0 0.0
    %418 = vmatpush1.msra.mxu0 0.0
    %419 = vmatprep.subr.mxu0 0.0
    %420 = vmatpush1.msra.mxu0 0.0
    %421 = vmatprep.subr.mxu0 0.0
    %422 = vmatpush1.msra.mxu0 0.0
    %423 = vmatprep.subr.mxu0 0.0
    %424 = vmatpush1.msra.mxu0 0.0
    %425 = vmatprep.subr.mxu0 0.0
    %426 = vmatpush1.msra.mxu0 0.0
    %427 = vmatprep.subr.mxu0 0.0
    %428 = vmatpush1.msra.mxu0 0.0
    %429 = vmatprep.mubr.f32.mxu0 0.0
    %430 = vmatmul.mubr.f32.gmra.mrb[0].mxu0 %v52
    %v431 = vpop.f32.mrb[0].mxu0
    %v432 = vadd.f32 %v202, %v431
    %v433 = vpop.f32.mrb[0].mxu0
    %v434 = vadd.f32 %v206, %v433
    %435 = vdwg.mxu0
    %436 = vmatprep.subr.mxu0 %v60
    %437 = vmatpush1.msra.mxu0 %v59
    %438 = vmatprep.subr.mxu0 %v68
    %439 = vmatpush1.msra.mxu0 %v67
    %440 = vmatprep.subr.mxu0 %v76
    %441 = vmatpush1.msra.mxu0 %v75
    %442 = vmatprep.subr.mxu0 %v84
    %443 = vmatpush1.msra.mxu0 %v83
    %444 = vmatprep.subr.mxu0 %v92
    %445 = vmatpush1.msra.mxu0 %v91
    %446 = vmatprep.subr.mxu0 %v100
    %447 = vmatpush1.msra.mxu0 %v99
    %448 = vmatprep.subr.mxu0 %v108
    %449 = vmatpush1.msra.mxu0 %v107
    %450 = vmatprep.subr.mxu0 %v116
    %451 = vmatpush1.msra.mxu0 %v115
    %452 = vmatprep.subr.mxu0 %v124
    %453 = vmatpush1.msra.mxu0 %v123
    %454 = vmatprep.subr.mxu0 %v132
    %455 = vmatpush1.msra.mxu0 %v131
    %456 = vmatprep.subr.mxu0 %v140
    %457 = vmatpush1.msra.mxu0 %v139
    %458 = vmatprep.subr.mxu0 %v148
    %459 = vmatpush1.msra.mxu0 %v147
    %460 = vmatprep.subr.mxu0 %v156
    %461 = vmatpush1.msra.mxu0 %v155
    %462 = vmatprep.subr.mxu0 %v164
    %463 = vmatpush1.msra.mxu0 %v163
    %464 = vmatprep.subr.mxu0 %v172
    %465 = vmatpush1.msra.mxu0 %v171
    %466 = vmatprep.subr.mxu0 %v180
    %467 = vmatpush1.msra.mxu0 %v179
    %468 = vmatprep.subr.mxu0 0.0
    %469 = vmatpush1.msra.mxu0 0.0
    %470 = vmatprep.subr.mxu0 0.0
    %471 = vmatpush1.msra.mxu0 0.0
    %472 = vmatprep.subr.mxu0 0.0
    %473 = vmatpush1.msra.mxu0 0.0
    %474 = vmatprep.subr.mxu0 0.0
    %475 = vmatpush1.msra.mxu0 0.0
    %476 = vmatprep.subr.mxu0 0.0
    %477 = vmatpush1.msra.mxu0 0.0
    %478 = vmatprep.subr.mxu0 0.0
    %479 = vmatpush1.msra.mxu0 0.0
    %480 = vmatprep.subr.mxu0 0.0
    %481 = vmatpush1.msra.mxu0 0.0
    %482 = vmatprep.subr.mxu0 0.0
    %483 = vmatpush1.msra.mxu0 0.0
    %484 = vmatprep.subr.mxu0 0.0
    %485 = vmatpush1.msra.mxu0 0.0
    %486 = vmatprep.subr.mxu0 0.0
    %487 = vmatpush1.msra.mxu0 0.0
    %488 = vmatprep.subr.mxu0 0.0
    %489 = vmatpush1.msra.mxu0 0.0
    %490 = vmatprep.subr.mxu0 0.0
    %491 = vmatpush1.msra.mxu0 0.0
    %492 = vmatprep.subr.mxu0 0.0
    %493 = vmatpush1.msra.mxu0 0.0
    %494 = vmatprep.subr.mxu0 0.0
    %495 = vmatpush1.msra.mxu0 0.0
    %496 = vmatprep.subr.mxu0 0.0
    %497 = vmatpush1.msra.mxu0 0.0
    %498 = vmatprep.subr.mxu0 0.0
    %499 = vmatpush1.msra.mxu0 0.0
    %500 = vmatprep.mubr.f32.mxu0 0.0
    %501 = vmatmul.mubr.f32.gmra.mrb[0].mxu0 %v52
    %v502 = vpop.f32.mrb[0].mxu0
    %v503 = vadd.f32 %v210, %v502
    %v504 = vpop.f32.mrb[0].mxu0
    %v505 = vadd.f32 %v214, %v504
    %506 = vdwg.mxu0
    %v507 = vmax.f32 %v290, 0.0
    %v508 = vmax.f32 %v292, 0.0
    %v509 = vmax.f32 %v361, 0.0
    %v510 = vmax.f32 %v363, 0.0
    %v511 = vmax.f32 %v432, 0.0
    %v512 = vmax.f32 %v434, 0.0
    %v513 = vmax.f32 %v503, 0.0
    %v514 = vmax.f32 %v505, 0.0
    %v523 = vcombine.low %v507, %v508
    %v524 = vcombine.low %v509, %v510
    %v525 = vcombine.low %v511, %v512
    %v526 = vcombine.low %v513, %v514
    %v528 = vunpack.c.l.s4 1966171168
    %v529 = vunpack.c.0.s8 %v528
    %v530 = vlaneseq
    %v531 = vshrl.u32 %v530, 7
    %v532 = vsub.s32 %v529, %v531
    %v533 = vrot.slane %v523, %v532
    %v535 = vunpack.c.l.s4 1966171168
    %v536 = vunpack.c.0.s8 %v535
    %v537 = vlaneseq
    %v538 = vshrl.u32 %v537, 7
    %v539 = vsub.s32 %v536, %v538
    %v540 = vrot.slane %v524, %v539
    %v542 = vunpack.c.l.s4 1966171168
    %v543 = vunpack.c.0.s8 %v542
    %v544 = vlaneseq
    %v545 = vshrl.u32 %v544, 7
    %v546 = vsub.s32 %v543, %v545
    %v547 = vrot.slane %v525, %v546
    %v549 = vunpack.c.l.s4 1966171168
    %v550 = vunpack.c.0.s8 %v549
    %v551 = vlaneseq
    %v552 = vshrl.u32 %v551, 7
    %v553 = vsub.s32 %v550, %v552
    %v554 = vrot.slane %v526, %v553
    %v555 = vcombine.low %v533, %v540
    %v556 = vcombine.low %v547, %v554
    %v558 = vunpack.c.l.s4 1966171168
    %v559 = vunpack.c.0.s8 %v558
    %v560 = vlaneseq
    %v561 = vshrl.u32 %v560, 7
    %v562 = vsub.s32 %v559, %v561
    %v563 = vrot.slane %v555, %v562
    %v565 = vunpack.c.l.s4 1966171168
    %v566 = vunpack.c.0.s8 %v565
    %v567 = vlaneseq
    %v568 = vshrl.u32 %v567, 7
    %v569 = vsub.s32 %v566, %v568
    %v570 = vrot.slane %v556, %v569
    %v571 = vcombine.low %v563, %v570
    %573 = vst [vmem:[#allocation8] sm:$0xff] %v571
    // Predicated region
    $region26: #{tpu_custom_call.1} parent=1 // pred_check
      _
    $region27: #{tpu_custom_call.1} parent=1 // pred_check_branch
      %575 = sbr.rel (0) target = $region29
    $region28: #{tpu_custom_call.1} parent=1 // pred_region
      %s577 = ssub.s32 128, 128
      %578 = vsyncadd [#allocation4], %s577
      %s580 = sshll.u32 [#allocation8], 4
      %s581 = int_to_ptr.vmem [resolvable:$true] %s580
      %583 = dma.vmem_to_hbm [thread:$0]  %s581, 128, %s3, [#allocation4]
    $region29: #{tpu_custom_call.1} parent=1 // pred_fallthru
      _
    // Predicated region
    $region30: #{tpu_custom_call.1} parent=1 // pred_check
      _
    $region31: #{tpu_custom_call.1} parent=1 // pred_check_branch
      %585 = sbr.rel (0) target = $region33
    $region32: #{tpu_custom_call.1} parent=1 // pred_region
      %586 = dma.done [#allocation4], 128
    $region33: #{tpu_custom_call.1} parent=1 // pred_fallthru
      _
    %587 = vsyncpa [#allocation3], 1
    %588 = vsyncpa [#allocation6], 1
    %589 = vsyncpa [#allocation4], 1

</llo_original>
